<compile_context>
chip_gen: v6e
topology: v6e:2x2x1
jax: 0.10.0
libtpu: 0.0.40
codegen_flags: <defaults>
</compile_context>

<pallas_src>
import jax
import jax.numpy as jnp
from jax.experimental import pallas as pl
from jax.experimental.pallas import tpu as pltpu

EPS = 1e-10


def _l2norm_kernel(x_ref, w_ref, o_ref):
    # x_ref: (n_blk, C, block_hw) -- C on sublanes, H*W chunk on lanes
    # w_ref: (1, C, 1)            -- per-channel scale, f32, replicated across grid
    # o_ref: (n_blk, C, block_hw)
    x = x_ref[...].astype(jnp.float32)                     # no-op for f32 inputs
    ss = jnp.sum(x * x, axis=1, keepdims=True)             # (n_blk, 1, bhw) sublane reduce
    # Match torch: sqrt(sum) + eps, then divide. One reciprocal per lane,
    # approx=False keeps full precision for the 1e-5 check.
    inv = pl.reciprocal(jnp.sqrt(ss) + EPS, approx=False)  # (n_blk, 1, bhw)
    y = (x * inv) * w_ref[...]                             # (1, C, 1) broadcast
    o_ref[...] = y.astype(o_ref.dtype)


def _round_up_128(v):
    return ((v + 127) // 128) * 128


def _choose_blocks(N, C, HW, dtype_bytes, target_bytes=4 * 1024 * 1024):
    """Pick (n_blk, block_hw).

    ~4 MiB per input buffer -> ~16 MiB in flight with double-buffered in+out,
    which fits the explicit 32 MiB vmem limit on every TPU generation.
    """
    slab_bytes = C * HW * dtype_bytes  # one image's (C, HW) slab
    if N > 1 and slab_bytes < target_bytes:
        # Tiny per-image slab: take full HW (contiguous DMA rows) and batch N to
        # reach the DMA target, but keep >=2 grid steps along N for v7x's 2 TCs.
        n_blk = max(1, min(target_bytes // max(1, slab_bytes), pl.cdiv(N, 2)))
        return n_blk, HW
    # Block over HW only.
    target_elems = target_bytes // max(1, C * dtype_bytes)
    blk = max(128, (target_elems // 128) * 128)
    if HW > blk:
        return 1, blk
    block_hw = HW
    # Small single-image case: expose >=2 grid steps along HW so both v7x
    # TensorCores get work (v5e/v6e single-TC: harmless).
    if N == 1 and HW > 128:
        block_hw = min(_round_up_128(pl.cdiv(HW, 2)), HW)
    return 1, block_hw


def l2norm(x_nchw, weight):
    """x_nchw: (N, C, H, W), weight: (C,) -> (N, C, H, W)"""
    N, C, H, W = x_nchw.shape
    HW = H * W

    # Free reshapes only (no transposes): NCHW -> (N, C, HW)
    x3d = x_nchw.reshape(N, C, HW)
    w3d = weight.astype(jnp.float32).reshape(1, C, 1)  # cast once in the wrapper

    dtype_bytes = jnp.dtype(x_nchw.dtype).itemsize
    n_blk, block_hw = _choose_blocks(N, C, HW, dtype_bytes)
    grid = (pl.cdiv(N, n_blk), pl.cdiv(HW, block_hw))

    cost = pl.CostEstimate(
        flops=3 * N * C * HW,                                  # square, reduce-add, scale
        transcendentals=N * HW,                                # sqrt + recip per lane
        bytes_accessed=2 * N * C * HW * dtype_bytes + C * 4,   # read x + write out + weight
    )

    out3d = pl.pallas_call(
        _l2norm_kernel,
        out_shape=jax.ShapeDtypeStruct((N, C, HW), x_nchw.dtype),
        grid_spec=pltpu.PrefetchScalarGridSpec(
            num_scalar_prefetch=0,
            grid=grid,
            in_specs=[
                pl.BlockSpec((n_blk, C, block_hw), lambda i, j: (i, 0, j)),  # x tile
                pl.BlockSpec((1, C, 1), lambda i, j: (0, 0, 0)),             # weight
            ],
            out_specs=pl.BlockSpec((n_blk, C, block_hw), lambda i, j: (i, 0, j)),
        ),
        compiler_params=pltpu.CompilerParams(
            dimension_semantics=("parallel", "parallel"),  # both axes shardable (v7x 2 TCs)
            vmem_limit_bytes=32 * 1024 * 1024,             # safe on v5e/v6e/v7x, room for 4 MiB blocks
        ),
        cost_estimate=cost,
    )(x3d, w3d)

    return out3d.reshape(N, C, H, W)


if __name__ == "__main__":
    # L2Norm(32, 1): n_channels=32, gamma(scale)=1 -> weight initialized to 1.0
    n_channels = 32
    scale = 1.0
    weight = jnp.full((n_channels,), scale, dtype=jnp.float32)

    key = jax.random.PRNGKey(0)
    x = jax.random.normal(key, (1, n_channels, 30, 40), dtype=jnp.float32)

    out = l2norm(x, weight)
    out = jax.block_until_ready(out)

    # Reference check in plain JAX (mirrors the torch forward exactly).
    norm = jnp.sqrt(jnp.sum(x * x, axis=1, keepdims=True)) + EPS
    ref = weight[None, :, None, None] * (x / norm)
    assert out.shape == x.shape and out.dtype == x.dtype
    assert jnp.allclose(out, ref, atol=1e-5, rtol=1e-5)

    print("KERNEL_OK")
</pallas_src>

<mosaic_0001>
module attributes {stable_mosaic.version = 11 : i64} {
  func.func @_l2norm_kernel(%arg0: i32, %arg1: i32, %arg2: memref<1x32x640xf32, #tpu.memory_space<vmem>>, %arg3: memref<1x32x1xf32, #tpu.memory_space<vmem>>, %arg4: memref<1x32x640xf32, #tpu.memory_space<vmem>>) attributes {dimension_semantics = [#tpu.dimension_semantics<parallel>, #tpu.dimension_semantics<parallel>], iteration_bounds = array<i64: 1, 2>, scalar_prefetch = 0 : i64, scratch_operands = 0 : i64, tpu.core_type = #tpu.core_type<tc>, window_params = [{transform_indices = @transform_0, window_bounds = array<i64: 1, 32, 640>}, {pipeline_mode = #tpu.pipeline_mode<synchronous>, transform_indices = @transform_1, window_bounds = array<i64: 1, 32, 1>}, {transform_indices = @transform_2, window_bounds = array<i64: 1, 32, 640>}]} {
    %c0 = arith.constant 0 : index
    %c0_0 = arith.constant 0 : index
    %c0_1 = arith.constant 0 : index
    %0 = vector.load %arg2[%c0, %c0_0, %c0_1] : memref<1x32x640xf32, #tpu.memory_space<vmem>>, vector<1x32x640xf32>
    %1 = arith.mulf %0, %0 : vector<1x32x640xf32>
    %cst = arith.constant dense<0.000000e+00> : vector<1x640xf32>
    %2 = vector.multi_reduction <add>, %1, %cst [1] : vector<1x32x640xf32> to vector<1x640xf32>
    %3 = vector.shape_cast %2 : vector<1x640xf32> to vector<1x1x640xf32>
    %4 = math.sqrt %3 : vector<1x1x640xf32>
    %cst_2 = arith.constant 1.000000e-10 : f32
    %5 = vector.broadcast %cst_2 : f32 to vector<1x1x640xf32>
    %6 = arith.addf %4, %5 : vector<1x1x640xf32>
    %7 = tpu.reciprocal %6 : vector<1x1x640xf32> -> vector<1x1x640xf32>
    %8 = vector.broadcast %7 : vector<1x1x640xf32> to vector<1x32x640xf32>
    %9 = arith.mulf %0, %8 : vector<1x32x640xf32>
    %c0_3 = arith.constant 0 : index
    %c0_4 = arith.constant 0 : index
    %c0_5 = arith.constant 0 : index
    %10 = vector.load %arg3[%c0_3, %c0_4, %c0_5] : memref<1x32x1xf32, #tpu.memory_space<vmem>>, vector<1x32x1xf32>
    %11 = vector.broadcast %10 : vector<1x32x1xf32> to vector<1x32x640xf32>
    %12 = arith.mulf %9, %11 : vector<1x32x640xf32>
    %c0_6 = arith.constant 0 : index
    %c0_7 = arith.constant 0 : index
    %c0_8 = arith.constant 0 : index
    %13 = vector.load %arg4[%c0_6, %c0_7, %c0_8] : memref<1x32x640xf32, #tpu.memory_space<vmem>>, vector<1x32x640xf32>
    tpu.vector_store %arg4[%c0_6, %c0_7, %c0_8], %12 {strides = array<i32>} : memref<1x32x640xf32, #tpu.memory_space<vmem>>, vector<1x32x640xf32>,
    return
  }
  func.func @transform_0(%arg0: i32, %arg1: i32) -> (i32, i32, i32) {
    %c0_i32 = arith.constant 0 : i32
    %c0_i32_0 = arith.constant 0 : i32
    return %arg0, %c0_i32, %arg1 : i32, i32, i32
  }
  func.func @transform_1(%arg0: i32, %arg1: i32) -> (i32, i32, i32) {
    %c0_i32 = arith.constant 0 : i32
    %c0_i32_0 = arith.constant 0 : i32
    %c0_i32_1 = arith.constant 0 : i32
    %c0_i32_2 = arith.constant 0 : i32
    return %c0_i32, %c0_i32_0, %c0_i32_1 : i32, i32, i32
  }
  func.func @transform_2(%arg0: i32, %arg1: i32) -> (i32, i32, i32) {
    %c0_i32 = arith.constant 0 : i32
    %c0_i32_0 = arith.constant 0 : i32
    return %arg0, %c0_i32, %arg1 : i32, i32, i32
  }
}

</mosaic_0001>

<llo_original>
// kernel: tpu_custom_call.1
$region0: #{tpu_custom_call.1}
  #allocation0 [shape = 'u32[]', space=smem, size = 0x4, offset = 0x4, fixed_abs, tag = 'smem constant byte address 0x4 - core index']
  #allocation1 [shape = 'u32[144,128]{1,0:T(1,128)}', space=vmem, size = 0x12000, scoped, tag = 'internal scratch']
  %s0 = inlined_call_operand.hbm [shape: f32[1,32,1200], index: 0, kind: input, shape index: {}]
  %s1 = inlined_call_operand.vmem [shape: f32[1,32,1], index: 1, kind: input, shape index: {}]
  %s2 = inlined_call_operand.hbm [shape: f32[1,32,1200], index: 2, kind: output, shape index: {}]
  %s3 = sld [smem:[#allocation0]]
  $region45: #{tpu_custom_call.1} parent=0
    _
  %s5 = ssub.s32 1, %s3
  %s6 = scalar_select 0, %s5, %s3
  $region1: #{tpu_custom_call.1} parent=0
    #allocation2 [shape = 'u8[163840]{0}', space=vmem, size = 0x28000, scoped, tag = 'input window, operand 0']
    #allocation3 [shape = 's32[2]{0}', space=sflag, size = 0x8, scoped, tag = 'scoped memory for tpu_custom_call.1']
    #allocation4 [shape = 's32[2]{0}', space=sflag, size = 0x8, scoped, tag = 'scoped memory for tpu_custom_call.1']
    #allocation5 [shape = 'u8[163840]{0}', space=vmem, size = 0x28000, scoped, tag = 'output window, operand 0']
    %7 = vsyncpa [#allocation3], 0
    %s8 = scalar_lea.sflag [#allocation3], 1
    %9 = vsyncpa %s8, 0
    %10 = vsyncpa [#allocation4], 0
    %s11 = scalar_lea.sflag [#allocation4], 1
    %12 = vsyncpa %s11, 0
    loop: start=0, step=1, limit=4
    $region2: #{tpu_custom_call.1} parent=1 // loop_pre_header
      _
    $region3: #{tpu_custom_call.1} parent=1 // loop_header
      %s14 = sphi 0, %s18
      %p15 = scmp.ge.s32.totalorder %s14, 4
      %s21 = sphi 0, %s33
      %s22 = sphi 0, %s29
      %s23 = sphi 0, %s21
      %s24 = sphi 0, %s22
      %s25 = sphi 0, %s23
      %s26 = sphi 0, %s24
      %s38 = sphi 0, %s40
      %s41 = sphi 0, %s38
      %s42 = sphi 0, %s41
      %s58 = sphi 0, %s42
      %s62 = sphi 0, %s62
      %s64 = sphi 0, %s62
      %s65 = sphi 0, %s64
      %s79 = sphi 0, %s65
      %s87 = sphi 0, %s89
      %s90 = sphi 0, %s87
      %s91 = sphi 0, %s90
      %s107 = sphi 0, %s91
    $region4: #{tpu_custom_call.1} parent=1 // loop_header_branch
      %17 = sbr.rel (%p15) target = $region8
    $region5: #{tpu_custom_call.1} parent=1 // loop_body
      %s19 = ssub.s32 %s14, 1
      %s20 = ssub.s32 %s14, 2
      %s27 = sadd.s32 1, %s22
      %p28 = scmp.ge.s32.totalorder %s27, 2
      %s29 = scalar_select %p28, 0, %s27
      %s30 = sadd.s32 1, %s21
      %s31 = scalar_select %p28, %s30, %s21
      %p32 = scmp.ge.s32.totalorder %s31, 1
      %s33 = scalar_select %p32, 0, %s31
      %s34 = ssub.s32 %s21, %s33
      %s35 = ssub.s32 %s22, %s29
      %s36 = sor.u32 %s34, %s35
      %p37 = scmp.eq.s32.totalorder %s36, 0
      %s39 = sadd.s32 %s38, 1
      %s40 = scalar_select %p37, %s38, %s39
      %p43 = pneg %p37
      %p44 = scmp.eq.s32.totalorder %s14, 1
      %p45 = por %p43, %p44
      %p46 = scmp.ne.s32.totalorder %s38, %s41
      %p47 = scmp.eq.s32.totalorder %s14, 0
      %p48 = por %p46, %p47
      %p49 = scmp.ne.s32.totalorder %s38, %s41
      %p50 = scmp.eq.s32.totalorder %s19, 1
      %p51 = por %p49, %p50
      %p52 = scmp.ne.s32.totalorder %s41, %s42
      %p53 = scmp.eq.s32.totalorder %s19, 0
      %p54 = por %p52, %p53
      %p55 = scmp.ne.s32.totalorder %s41, %s42
      %p56 = scmp.eq.s32.totalorder %s20, 1
      %p57 = por %p55, %p56
      %p59 = scmp.ne.s32.totalorder %s42, %s58
      %p60 = scmp.eq.s32.totalorder %s20, 0
      %p61 = por %p59, %p60
      %s63 = sadd.s32 %s62, 1
      %p66 = scmp.eq.s32.totalorder %s14, 1
      %p67 = scmp.ne.s32.totalorder %s62, %s64
      %p68 = scmp.eq.s32.totalorder %s14, 0
      %p69 = por %p67, %p68
      %p70 = scmp.ne.s32.totalorder %s62, %s64
      %p71 = scmp.eq.s32.totalorder %s19, 1
      %p72 = por %p70, %p71
      %p73 = scmp.ne.s32.totalorder %s64, %s65
      %p74 = scmp.eq.s32.totalorder %s19, 0
      %p75 = por %p73, %p74
      %p76 = scmp.ne.s32.totalorder %s64, %s65
      %p77 = scmp.eq.s32.totalorder %s20, 1
      %p78 = por %p76, %p77
      %p80 = scmp.ne.s32.totalorder %s65, %s79
      %p81 = scmp.eq.s32.totalorder %s20, 0
      %p82 = por %p80, %p81
      %s83 = ssub.s32 %s21, %s33
      %s84 = ssub.s32 %s22, %s29
      %s85 = sor.u32 %s83, %s84
      %p86 = scmp.eq.s32.totalorder %s85, 0
      %s88 = sadd.s32 %s87, 1
      %s89 = scalar_select %p86, %s87, %s88
      %p92 = pneg %p86
      %p93 = scmp.eq.s32.totalorder %s14, 1
      %p94 = por %p92, %p93
      %p95 = scmp.ne.s32.totalorder %s87, %s90
      %p96 = scmp.eq.s32.totalorder %s14, 0
      %p97 = por %p95, %p96
      %p98 = scmp.ne.s32.totalorder %s87, %s90
      %p99 = scmp.eq.s32.totalorder %s19, 1
      %p100 = por %p98, %p99
      %p101 = scmp.ne.s32.totalorder %s90, %s91
      %p102 = scmp.eq.s32.totalorder %s19, 0
      %p103 = por %p101, %p102
      %p104 = scmp.ne.s32.totalorder %s90, %s91
      %p105 = scmp.eq.s32.totalorder %s20, 1
      %p106 = por %p104, %p105
      %p108 = scmp.ne.s32.totalorder %s91, %s107
      %p109 = scmp.eq.s32.totalorder %s20, 0
      %p110 = por %p108, %p109
      %p111 = scmp.le.s32.totalorder 1, %s14
      %p112 = scmp.lt.s32.totalorder %s14, 3
      %p113 = pnand %p111, %p112
      %p114 = pneg %p113
      // Predicated region
      $region9: #{tpu_custom_call.1} parent=5 // pred_check
        _
      $region10: #{tpu_custom_call.1} parent=5 // pred_check_branch
        %116 = sbr.rel (%p113) target = $region12
      $region11: #{tpu_custom_call.1} parent=5 // pred_region
        %s117 = ssub.s32 %s14, 1
        // Predicated region
        $region13: #{tpu_custom_call.1} parent=11 // pred_check
          %p118 = pneg %p75
        $region14: #{tpu_custom_call.1} parent=11 // pred_check_branch
          %120 = sbr.rel (%p118) target = $region16
        $region15: #{tpu_custom_call.1} parent=11 // pred_region
          _
        $region16: #{tpu_custom_call.1} parent=11 // pred_fallthru
          _
      $region12: #{tpu_custom_call.1} parent=5 // pred_fallthru
        _
      %p121 = scmp.lt.s32.totalorder %s14, 2
      // Predicated region
      $region17: #{tpu_custom_call.1} parent=5 // pred_check
        %p122 = pneg %p121
      $region18: #{tpu_custom_call.1} parent=5 // pred_check_branch
        %124 = sbr.rel (%p122) target = $region20
      $region19: #{tpu_custom_call.1} parent=5 // pred_region
        // Predicated region
        $region21: #{tpu_custom_call.1} parent=19 // pred_check
          %p125 = pneg %p48
        $region22: #{tpu_custom_call.1} parent=19 // pred_check_branch
          %127 = sbr.rel (%p125) target = $region24
        $region23: #{tpu_custom_call.1} parent=19 // pred_region
          %s128 = sand.u32 %s38, 1
          %s129 = scalar_lea.sflag [#allocation3], %s128
          %s130 = sand.u32 %s38, 1
          %s131 = smul.addr %s130, 160
          %s132 = scalar_lea.vmem [#allocation2], %s131
          %s133 = smul.u32 5, %s22
          %s135 = ssub.s32 2560, 2560
          %136 = vsyncadd %s129, %s135
          %s137 = smul.addr %s21, 40
          %s138 = sadd.s32 %s133, %s137
          %s139 = smul.addr %s138, 128
          %s140 = scalar_lea.hbm %s0, %s139
          %s141 = sshll.u32 %s132, 4
          %s142 = int_to_ptr.vmem [resolvable:$true] %s141
          %147 = dma.hbm_to_vmem [thread:$0]  %s140, 2560, %s142, %s129, 1280, 640, 40
        $region24: #{tpu_custom_call.1} parent=19 // pred_fallthru
          _
      $region20: #{tpu_custom_call.1} parent=5 // pred_fallthru
        _
      %p148 = scmp.le.s32.totalorder 1, %s14
      %p149 = scmp.lt.s32.totalorder %s14, 3
      %p150 = pnand %p148, %p149
      %p151 = pneg %p150
      // Predicated region
      $region25: #{tpu_custom_call.1} parent=5 // pred_check
        _
      $region26: #{tpu_custom_call.1} parent=5 // pred_check_branch
        %153 = sbr.rel (%p150) target = $region28
      $region27: #{tpu_custom_call.1} parent=5 // pred_region
        %s154 = ssub.s32 %s14, 1
        %s155 = sand.u32 %s41, 1
        %s156 = scalar_lea.sflag [#allocation3], %s155
        %s157 = sand.u32 %s41, 1
        %s158 = smul.addr %s157, 160
        %s159 = scalar_lea.vmem [#allocation2], %s158
        // Predicated region
        $region29: #{tpu_custom_call.1} parent=27 // pred_check
          %p160 = pneg %p54
        $region30: #{tpu_custom_call.1} parent=27 // pred_check_branch
          %162 = sbr.rel (%p160) target = $region32
        $region31: #{tpu_custom_call.1} parent=27 // pred_region
          %163 = dma.done %s156, 2560
        $region32: #{tpu_custom_call.1} parent=27 // pred_fallthru
          _
        %s164 = sand.u32 %s41, 1
        %s165 = scalar_lea.sflag [#allocation3], %s164
        %s166 = sand.u32 %s41, 1
        %s167 = smul.addr %s166, 160
        %s168 = scalar_lea.vmem [#allocation2], %s167
        %p169 = pneg %p54
        %p170 = pneg %p51
        %p171 = pneg %p75
        %p172 = pneg %p72
        %p173 = pneg %p103
        %p174 = pneg %p100
        %s175 = sand.u32 %s90, 1
        %s176 = scalar_lea.sflag [#allocation4], %s175
        %s177 = sand.u32 %s90, 1
        %s178 = smul.addr %s177, 160
        %s179 = scalar_lea.vmem [#allocation5], %s178
        %s180 = smul.u32 5, %s24
        %s181 = smul.u32 5, %s24
        %v182 = vld [vmem:[%s159] sm:$0xff]
        %v183 = vld [vmem:[%s159 + $0x8] sm:$0xff]
        %v184 = vld [vmem:[%s159 + $0x10] sm:$0xff]
        %v185 = vld [vmem:[%s159 + $0x18] sm:$0xff]
        %v186 = vld [vmem:[%s159 + $0x20] sm:$0xff]
        %v187 = vld [vmem:[%s159 + $0x28] sm:$0xff]
        %v188 = vld [vmem:[%s159 + $0x30] sm:$0xff]
        %v189 = vld [vmem:[%s159 + $0x38] sm:$0xff]
        %v190 = vld [vmem:[%s159 + $0x40] sm:$0xff]
        %v191 = vld [vmem:[%s159 + $0x48] sm:$0xff]
        %v192 = vld [vmem:[%s159 + $0x50] sm:$0xff]
        %v193 = vld [vmem:[%s159 + $0x58] sm:$0xff]
        %v194 = vld [vmem:[%s159 + $0x60] sm:$0xff]
        %v195 = vld [vmem:[%s159 + $0x68] sm:$0xff]
        %v196 = vld [vmem:[%s159 + $0x70] sm:$0xff]
        %v197 = vld [vmem:[%s159 + $0x78] sm:$0xff]
        %v198 = vld [vmem:[%s159 + $0x80] sm:$0xff]
        %v199 = vld [vmem:[%s159 + $0x88] sm:$0xff]
        %v200 = vld [vmem:[%s159 + $0x90] sm:$0xff]
        %v201 = vld [vmem:[%s159 + $0x98] sm:$0xff]
        %v202 = vmul.f32 %v182, %v182
        %v203 = vmul.f32 %v183, %v183
        %v204 = vmul.f32 %v184, %v184
        %v205 = vmul.f32 %v185, %v185
        %v206 = vmul.f32 %v186, %v186
        %v207 = vmul.f32 %v187, %v187
        %v208 = vmul.f32 %v188, %v188
        %v209 = vmul.f32 %v189, %v189
        %v210 = vmul.f32 %v190, %v190
        %v211 = vmul.f32 %v191, %v191
        %v212 = vmul.f32 %v192, %v192
        %v213 = vmul.f32 %v193, %v193
        %v214 = vmul.f32 %v194, %v194
        %v215 = vmul.f32 %v195, %v195
        %v216 = vmul.f32 %v196, %v196
        %v217 = vmul.f32 %v197, %v197
        %v218 = vmul.f32 %v198, %v198
        %v219 = vmul.f32 %v199, %v199
        %v220 = vmul.f32 %v200, %v200
        %v221 = vmul.f32 %v201, %v201
        %v222 = vadd.f32 %v202, %v207
        %v223 = vadd.f32 %v222, %v212
        %v224 = vadd.f32 %v223, %v217
        %v225 = vrot.slane %v224, 4
        %v226 = vadd.f32 %v224, %v225
        %v227 = vrot.slane %v226, 2
        %v228 = vadd.f32 %v226, %v227
        %v229 = vrot.slane %v228, 1
        %v230 = vadd.f32 %v228, %v229
        %v231 = vadd.f32 %v203, %v208
        %v232 = vadd.f32 %v231, %v213
        %v233 = vadd.f32 %v232, %v218
        %v234 = vrot.slane %v233, 4
        %v235 = vadd.f32 %v233, %v234
        %v236 = vrot.slane %v235, 2
        %v237 = vadd.f32 %v235, %v236
        %v238 = vrot.slane %v237, 1
        %v239 = vadd.f32 %v237, %v238
        %v240 = vadd.f32 %v204, %v209
        %v241 = vadd.f32 %v240, %v214
        %v242 = vadd.f32 %v241, %v219
        %v243 = vrot.slane %v242, 4
        %v244 = vadd.f32 %v242, %v243
        %v245 = vrot.slane %v244, 2
        %v246 = vadd.f32 %v244, %v245
        %v247 = vrot.slane %v246, 1
        %v248 = vadd.f32 %v246, %v247
        %v249 = vadd.f32 %v205, %v210
        %v250 = vadd.f32 %v249, %v215
        %v251 = vadd.f32 %v250, %v220
        %v252 = vrot.slane %v251, 4
        %v253 = vadd.f32 %v251, %v252
        %v254 = vrot.slane %v253, 2
        %v255 = vadd.f32 %v253, %v254
        %v256 = vrot.slane %v255, 1
        %v257 = vadd.f32 %v255, %v256
        %v258 = vadd.f32 %v206, %v211
        %v259 = vadd.f32 %v258, %v216
        %v260 = vadd.f32 %v259, %v221
        %v261 = vrot.slane %v260, 4
        %v262 = vadd.f32 %v260, %v261
        %v263 = vrot.slane %v262, 2
        %v264 = vadd.f32 %v262, %v263
        %v265 = vrot.slane %v264, 1
        %v266 = vadd.f32 %v264, %v265
        %v267 = vrsqrt.pop %v230
        %v268 = vmul.f32 %v230, %v267
        %vm269 = vcmp.eq.f32.partialorder %v230, inf
        %v270 = vsel %vm269, %v230, %v268
        %vm271 = vcmp.eq.f32.partialorder %v230, 0.0
        %v272 = vand.u32 %v230, 2147483648
        %v273 = vsel %vm271, %v272, %v270
        %v274 = vrsqrt.pop %v239
        %v275 = vmul.f32 %v239, %v274
        %vm276 = vcmp.eq.f32.partialorder %v239, inf
        %v277 = vsel %vm276, %v239, %v275
        %vm278 = vcmp.eq.f32.partialorder %v239, 0.0
        %v279 = vand.u32 %v239, 2147483648
        %v280 = vsel %vm278, %v279, %v277
        %v281 = vrsqrt.pop %v248
        %v282 = vmul.f32 %v248, %v281
        %vm283 = vcmp.eq.f32.partialorder %v248, inf
        %v284 = vsel %vm283, %v248, %v282
        %vm285 = vcmp.eq.f32.partialorder %v248, 0.0
        %v286 = vand.u32 %v248, 2147483648
        %v287 = vsel %vm285, %v286, %v284
        %v288 = vrsqrt.pop %v257
        %v289 = vmul.f32 %v257, %v288
        %vm290 = vcmp.eq.f32.partialorder %v257, inf
        %v291 = vsel %vm290, %v257, %v289
        %vm292 = vcmp.eq.f32.partialorder %v257, 0.0
        %v293 = vand.u32 %v257, 2147483648
        %v294 = vsel %vm292, %v293, %v291
        %v295 = vrsqrt.pop %v266
        %v296 = vmul.f32 %v266, %v295
        %vm297 = vcmp.eq.f32.partialorder %v266, inf
        %v298 = vsel %vm297, %v266, %v296
        %vm299 = vcmp.eq.f32.partialorder %v266, 0.0
        %v300 = vand.u32 %v266, 2147483648
        %v301 = vsel %vm299, %v300, %v298
        %v302 = vadd.f32 %v273, 1e-10
        %v303 = vadd.f32 %v280, 1e-10
        %v304 = vadd.f32 %v287, 1e-10
        %v305 = vadd.f32 %v294, 1e-10
        %v306 = vadd.f32 %v301, 1e-10
        %v307 = vrcp.pop %v302
        %v308 = vrcp.pop %v303
        %v309 = vrcp.pop %v304
        %v310 = vrcp.pop %v305
        %v311 = vrcp.pop %v306
        %v312 = vmul.f32 %v182, %v307
        %v313 = vmul.f32 %v183, %v308
        %v314 = vmul.f32 %v184, %v309
        %v315 = vmul.f32 %v185, %v310
        %v316 = vmul.f32 %v186, %v311
        %v317 = vmul.f32 %v187, %v307
        %v318 = vmul.f32 %v188, %v308
        %v319 = vmul.f32 %v189, %v309
        %v320 = vmul.f32 %v190, %v310
        %v321 = vmul.f32 %v191, %v311
        %v322 = vmul.f32 %v192, %v307
        %v323 = vmul.f32 %v193, %v308
        %v324 = vmul.f32 %v194, %v309
        %v325 = vmul.f32 %v195, %v310
        %v326 = vmul.f32 %v196, %v311
        %v327 = vmul.f32 %v197, %v307
        %v328 = vmul.f32 %v198, %v308
        %v329 = vmul.f32 %v199, %v309
        %v330 = vmul.f32 %v200, %v310
        %v331 = vmul.f32 %v201, %v311
        %v332 = vld [vmem:[%s1] sm:$0xff]
        %v333 = vld [vmem:[%s1 + $0x8] sm:$0xff]
        %v334 = vld [vmem:[%s1 + $0x10] sm:$0xff]
        %v335 = vld [vmem:[%s1 + $0x18] sm:$0xff]
        %337 = vset.pattern.permute.xlu0 0
        %338 = vperm.xlu0 %337, %v332
        %v339 = vpop.permute.xlu0 %338
        %342 = vset.pattern.permute.xlu0 0
        %343 = vperm.xlu0 %342, %v333
        %v344 = vpop.permute.xlu0 %343
        %347 = vset.pattern.permute.xlu0 0
        %348 = vperm.xlu0 %347, %v334
        %v349 = vpop.permute.xlu0 %348
        %352 = vset.pattern.permute.xlu0 0
        %353 = vperm.xlu0 %352, %v335
        %v354 = vpop.permute.xlu0 %353
        %v356 = vmul.f32 %v312, %v339
        %v357 = vmul.f32 %v313, %v339
        %v358 = vmul.f32 %v314, %v339
        %v359 = vmul.f32 %v315, %v339
        %v360 = vmul.f32 %v316, %v339
        %v361 = vmul.f32 %v317, %v344
        %v362 = vmul.f32 %v318, %v344
        %v363 = vmul.f32 %v319, %v344
        %v364 = vmul.f32 %v320, %v344
        %v365 = vmul.f32 %v321, %v344
        %v366 = vmul.f32 %v322, %v349
        %v367 = vmul.f32 %v323, %v349
        %v368 = vmul.f32 %v324, %v349
        %v369 = vmul.f32 %v325, %v349
        %v370 = vmul.f32 %v326, %v349
        %v371 = vmul.f32 %v327, %v354
        %v372 = vmul.f32 %v328, %v354
        %v373 = vmul.f32 %v329, %v354
        %v374 = vmul.f32 %v330, %v354
        %v375 = vmul.f32 %v331, %v354
        %376 = vst [vmem:[%s179] sm:$0xff] %v356
        %377 = vst [vmem:[%s179 + $0x8] sm:$0xff] %v357
        %378 = vst [vmem:[%s179 + $0x10] sm:$0xff] %v358
        %379 = vst [vmem:[%s179 + $0x18] sm:$0xff] %v359
        %380 = vst [vmem:[%s179 + $0x20] sm:$0xff] %v360
        %381 = vst [vmem:[%s179 + $0x28] sm:$0xff] %v361
        %382 = vst [vmem:[%s179 + $0x30] sm:$0xff] %v362
        %383 = vst [vmem:[%s179 + $0x38] sm:$0xff] %v363
        %384 = vst [vmem:[%s179 + $0x40] sm:$0xff] %v364
        %385 = vst [vmem:[%s179 + $0x48] sm:$0xff] %v365
        %386 = vst [vmem:[%s179 + $0x50] sm:$0xff] %v366
        %387 = vst [vmem:[%s179 + $0x58] sm:$0xff] %v367
        %388 = vst [vmem:[%s179 + $0x60] sm:$0xff] %v368
        %389 = vst [vmem:[%s179 + $0x68] sm:$0xff] %v369
        %390 = vst [vmem:[%s179 + $0x70] sm:$0xff] %v370
        %391 = vst [vmem:[%s179 + $0x78] sm:$0xff] %v371
        %392 = vst [vmem:[%s179 + $0x80] sm:$0xff] %v372
        %393 = vst [vmem:[%s179 + $0x88] sm:$0xff] %v373
        %394 = vst [vmem:[%s179 + $0x90] sm:$0xff] %v374
        %395 = vst [vmem:[%s179 + $0x98] sm:$0xff] %v375
        %s396 = sand.u32 %s90, 1
        %s397 = scalar_lea.sflag [#allocation4], %s396
        %s398 = sand.u32 %s90, 1
        %s399 = smul.addr %s398, 160
        %s400 = scalar_lea.vmem [#allocation5], %s399
        // Predicated region
        $region33: #{tpu_custom_call.1} parent=27 // pred_check
          %p401 = pneg %p100
        $region34: #{tpu_custom_call.1} parent=27 // pred_check_branch
          %403 = sbr.rel (%p401) target = $region36
        $region35: #{tpu_custom_call.1} parent=27 // pred_region
          %s404 = smul.u32 5, %s24
          %s406 = ssub.s32 2560, 2560
          %407 = vsyncadd %s397, %s406
          %s408 = smul.addr %s23, 40
          %s409 = sadd.s32 %s404, %s408
          %s410 = smul.addr %s409, 128
          %s411 = scalar_lea.hbm %s2, %s410
          %s412 = sshll.u32 %s400, 4
          %s413 = int_to_ptr.vmem [resolvable:$true] %s412
          %418 = dma.vmem_to_hbm [thread:$0]  %s413, 2560, %s411, %s397, 640, 1280, 40
        $region36: #{tpu_custom_call.1} parent=27 // pred_fallthru
          _
      $region28: #{tpu_custom_call.1} parent=5 // pred_fallthru
        _
      %p419 = scmp.le.s32.totalorder 2, %s14
      // Predicated region
      $region37: #{tpu_custom_call.1} parent=5 // pred_check
        %p420 = pneg %p419
      $region38: #{tpu_custom_call.1} parent=5 // pred_check_branch
        %422 = sbr.rel (%p420) target = $region40
      $region39: #{tpu_custom_call.1} parent=5 // pred_region
        %s423 = ssub.s32 %s14, 2
        // Predicated region
        $region41: #{tpu_custom_call.1} parent=39 // pred_check
          %p424 = pneg %p106
        $region42: #{tpu_custom_call.1} parent=39 // pred_check_branch
          %426 = sbr.rel (%p424) target = $region44
        $region43: #{tpu_custom_call.1} parent=39 // pred_region
          %s427 = sand.u32 %s91, 1
          %s428 = scalar_lea.sflag [#allocation4], %s427
          %s429 = sand.u32 %s91, 1
          %s430 = smul.addr %s429, 160
          %s431 = scalar_lea.vmem [#allocation5], %s430
          %432 = dma.done %s428, 2560
        $region44: #{tpu_custom_call.1} parent=39 // pred_fallthru
          _
      $region40: #{tpu_custom_call.1} parent=5 // pred_fallthru
        _
    $region6: #{tpu_custom_call.1} parent=1 // loop_footer
      %s18 = sadd.s32 1, %s14
    $region7: #{tpu_custom_call.1} parent=1 // loop_footer_branch
      %13 = sbr.rel target = $region3
    $region8: #{tpu_custom_call.1} parent=1 // loop_exit
      _
    %433 = vsyncpa [#allocation3], 1
    %s434 = scalar_lea.sflag [#allocation3], 1
    %435 = vsyncpa %s434, 1
    %436 = vsyncpa [#allocation4], 1
    %s437 = scalar_lea.sflag [#allocation4], 1
    %438 = vsyncpa %s437, 1

</llo_original>
